<compile_context>
chip_gen: v7x
topology: tpu7x:2x2x1
jax: 0.10.0
libtpu: 0.0.40
codegen_flags: <defaults>
</compile_context>

<pallas_src>
from functools import partial

import jax
import jax.numpy as jnp
from jax.experimental import pallas as pl
from jax.experimental.pallas import tpu as pltpu


def _round_up(v, m):
    return ((v + m - 1) // m) * m


# ----------------------------------------------------------------------------
# Kernel 1: streaming channel sum / max over the flattened (lane-dense) view.
# ----------------------------------------------------------------------------
def _channel_reduce_kernel(x_ref, o_ref, *, C):
    # x_ref : (tc, HW)  input channel tile (N squeezed by BlockSpec)
    # o_ref : (2, HW)   f32, resident across channel steps
    #                   row 0 = channel sum (-> mean at the end), row 1 = max
    tc = x_ref.shape[0]
    c_step = pl.program_id(1)
    last_c = pl.num_programs(1) - 1
    rem = C % tc  # static; tail channels of the last (partial) tile

    def accum(nvalid):
        xs = x_ref[0:nvalid, :]                                   # static slice
        ps = jnp.sum(xs, axis=0, dtype=jnp.float32, keepdims=True)
        pm = jnp.max(xs, axis=0, keepdims=True).astype(jnp.float32)

        @pl.when(c_step == 0)
        def _():                                                   # first step: write
            o_ref[0:1, :] = ps
            o_ref[1:2, :] = pm

        @pl.when(c_step > 0)
        def _():                                                   # later steps: RMW
            o_ref[0:1, :] = o_ref[0:1, :] + ps
            o_ref[1:2, :] = jnp.maximum(o_ref[1:2, :], pm)

    if rem == 0:
        accum(tc)
    else:
        # cdiv grid: the last tile only has `rem` valid channels.
        @pl.when(c_step < last_c)
        def _():
            accum(tc)

        @pl.when(c_step == last_c)
        def _():
            accum(rem)

    @pl.when(c_step == last_c)
    def _():
        o_ref[0:1, :] = o_ref[0:1, :] * jnp.float32(1.0 / C)       # sum -> mean


# ----------------------------------------------------------------------------
# Kernel 2: reflect pad (3) + 7x7 conv (2 in-ch -> 1 out-ch), strip-mined.
# ----------------------------------------------------------------------------
def _conv7x7_kernel(m_ref, w_ref, b_ref, o_ref, pad0_ref, pad1_ref, *, H, W):
    # m_ref   : (2, H, W) f32   avg map / max map (N squeezed)
    # w_ref   : (2, 49)   SMEM  conv weight, flattened 7x7 taps per in-channel
    # b_ref   : (1,)      SMEM  conv bias
    # o_ref   : (H, W)          output
    # pad*_ref: (Hp, Wp) f32 VMEM lane-dense reflect-pad scratch
    def build_reflect_pad(pad_ref, m):
        # interior at (3, 3): strip reads below then start on row r0 (8-aligned)
        pad_ref[3:H + 3, 3:W + 3] = m
        # top / bottom reflected rows (pad=3, excludes the edge row itself)
        pad_ref[0:1, 3:W + 3] = m[3:4, :]
        pad_ref[1:2, 3:W + 3] = m[2:3, :]
        pad_ref[2:3, 3:W + 3] = m[1:2, :]
        pad_ref[H + 3:H + 4, 3:W + 3] = m[H - 2:H - 1, :]
        pad_ref[H + 4:H + 5, 3:W + 3] = m[H - 3:H - 2, :]
        pad_ref[H + 5:H + 6, 3:W + 3] = m[H - 4:H - 3, :]
        # left / right reflected columns (of the row-padded block)
        pad_ref[0:H + 6, 0:1] = pad_ref[0:H + 6, 6:7]
        pad_ref[0:H + 6, 1:2] = pad_ref[0:H + 6, 5:6]
        pad_ref[0:H + 6, 2:3] = pad_ref[0:H + 6, 4:5]
        pad_ref[0:H + 6, W + 3:W + 4] = pad_ref[0:H + 6, W + 1:W + 2]
        pad_ref[0:H + 6, W + 4:W + 5] = pad_ref[0:H + 6, W:W + 1]
        pad_ref[0:H + 6, W + 5:W + 6] = pad_ref[0:H + 6, W - 1:W]

    build_reflect_pad(pad0_ref, m_ref[0])
    build_reflect_pad(pad1_ref, m_ref[1])

    bias = b_ref[0]
    S = 8  # output row-strip height (one sublane group); accs stay in vregs

    for r0 in range(0, H, S):
        s = min(S, H - r0)
        # 4 independent accumulators break the serial FMA chain.
        accs = [jnp.zeros((s, W), jnp.float32) for _ in range(4)]
        tap = 0
        for c_in, pad_ref in enumerate((pad0_ref, pad1_ref)):
            # Load the (s+6, W+6) window of this strip ONCE.
            strip = pad_ref[r0:r0 + s + 6, 0:W + 6]
            for dj in range(7):
                colw = strip[:, dj:dj + W]            # one lane shift per dj
                for di in range(7):
                    wt = w_ref[c_in, di * 7 + dj]     # scalar from SMEM (sreg)
                    accs[tap % 4] = accs[tap % 4] + wt * colw[di:di + s, :]
                    tap += 1
        out = (accs[0] + accs[1]) + (accs[2] + accs[3]) + bias
        o_ref[r0:r0 + s, :] = out.astype(o_ref.dtype)  # one store per strip


# ----------------------------------------------------------------------------
# Wrapper
# ----------------------------------------------------------------------------
def spatial_attention(x, w, b):
    """x: (N, C, H, W) ; w: (1, 2, 7, 7) conv weight ; b: (1,) bias."""
    N, C, H, W = x.shape
    assert H >= 4 and W >= 4, "reflect padding of 3 requires H >= 4 and W >= 4"
    HW = H * W

    w_flat = w.reshape(2, 49).astype(jnp.float32)
    b_flat = b.reshape(1).astype(jnp.float32)

    # ---- VMEM budget (padded-tile math, generation aware) -------------------
    itemsize = x.dtype.itemsize
    sub = max(8, 32 // itemsize)                 # sublane group: 8 f32 / 16 bf16 / 32 i8
    lane_hw = _round_up(HW, 128)                 # lane-padded flattened width
    try:
        phys_vmem = int(getattr(pltpu.get_tpu_info(), "vmem_capacity_bytes",
                                64 * 1024 * 1024))
    except Exception:
        phys_vmem = 64 * 1024 * 1024             # conservative (v7x per-TC) fallback
    vmem_limit = min(phys_vmem * 3 // 4, 112 * 1024 * 1024)

    # Double-buffered (2, HW) f32 output block pads 2 -> 8 sublanes.
    out_foot = 2 * _round_up(2, 8) * lane_hw * 4
    slab = sub * lane_hw * itemsize              # bytes per sublane-group of channels
    tile_budget = max(slab, (vmem_limit - out_foot - (4 << 20)) // 3)

    full_bytes = _round_up(C, sub) * lane_hw * itemsize
    if full_bytes <= tile_budget:
        tc = C
    else:
        tc = min(C, max(1, tile_budget // slab) * sub)
    n_c = pl.cdiv(C, tc)

    # ---- Kernel 1: lane-dense streaming channel reduction -------------------
    x_flat = x.reshape(N, C, HW)
    maps = pl.pallas_call(
        partial(_channel_reduce_kernel, C=C),
        out_shape=jax.ShapeDtypeStruct((N, 2, HW), jnp.float32),
        grid=(N, n_c),
        in_specs=[pl.BlockSpec((pl.Squeezed(), tc, HW), lambda n, c: (n, c, 0))],
        out_specs=pl.BlockSpec((pl.Squeezed(), 2, HW), lambda n, c: (n, 0, 0)),
        compiler_params=pltpu.CompilerParams(
            dimension_semantics=("parallel", "arbitrary"),
            vmem_limit_bytes=vmem_limit,
        ),
    )(x_flat)

    # ---- Kernel 2: reflect pad + strip-mined 7x7 conv ------------------------
    maps_2d = maps.reshape(N, 2, H, W)
    Hp = _round_up(H + 6, 8)
    Wp = _round_up(W + 6, 128)

    out = pl.pallas_call(
        partial(_conv7x7_kernel, H=H, W=W),
        out_shape=jax.ShapeDtypeStruct((N, 1, H, W), x.dtype),
        grid=(N,),
        in_specs=[
            pl.BlockSpec((pl.Squeezed(), 2, H, W), lambda n: (n, 0, 0, 0)),
            pl.BlockSpec(memory_space=pltpu.MemorySpace.SMEM),
            pl.BlockSpec(memory_space=pltpu.MemorySpace.SMEM),
        ],
        out_specs=pl.BlockSpec((pl.Squeezed(), pl.Squeezed(), H, W),
                               lambda n: (n, 0, 0, 0)),
        scratch_shapes=[
            pltpu.VMEM((Hp, Wp), jnp.float32),   # reflect-padded avg map
            pltpu.VMEM((Hp, Wp), jnp.float32),   # reflect-padded max map
        ],
        compiler_params=pltpu.CompilerParams(
            dimension_semantics=("parallel",),
        ),
    )(maps_2d, w_flat, b_flat)
    return out


def spatial_attention_reference(x, w, b):
    """Pure-JAX reference mirroring the PyTorch forward exactly."""
    x_avg = jnp.mean(x, axis=1, keepdims=True)
    x_max = jnp.max(x, axis=1, keepdims=True)
    x2 = jnp.concatenate([x_avg, x_max], axis=1)
    x2p = jnp.pad(x2, ((0, 0), (0, 0), (3, 3), (3, 3)), mode="reflect")
    out = jax.lax.conv_general_dilated(
        x2p, w, window_strides=(1, 1), padding="VALID",
        dimension_numbers=("NCHW", "OIHW", "NCHW"))
    return out + b.reshape(1, 1, 1, 1)


if __name__ == "__main__":
    key = jax.random.PRNGKey(0)
    kx, kw, kb = jax.random.split(key, 3)

    # Small shapes consistent with the module: N=2, C=4, H=W=16.
    x = jax.random.normal(kx, (2, 4, 16, 16), dtype=jnp.float32)
    # nn.Conv2d(2, 1, 7) -> weight (1, 2, 7, 7), bias (1,)
    w = jax.random.normal(kw, (1, 2, 7, 7), dtype=jnp.float32) * 0.1
    b = jax.random.normal(kb, (1,), dtype=jnp.float32) * 0.1

    out = spatial_attention(x, w, b)
    out = jax.block_until_ready(out)

    ref = spatial_attention_reference(x, w, b)
    assert out.shape == (2, 1, 16, 16), out.shape
    assert jnp.allclose(out, ref, atol=1e-4, rtol=1e-4), float(jnp.max(jnp.abs(out - ref)))

    print("KERNEL_OK")
</pallas_src>

<mosaic_0001>
module attributes {stable_mosaic.version = 11 : i64} {
  func.func @_channel_reduce_kernel(%arg0: i32, %arg1: i32, %arg2: memref<1x4x256xf32, #tpu.memory_space<vmem>>, %arg3: memref<1x2x256xf32, #tpu.memory_space<vmem>>) attributes {dimension_semantics = [#tpu.dimension_semantics<parallel>, #tpu.dimension_semantics<arbitrary>], iteration_bounds = array<i64: 2, 1>, scalar_prefetch = 0 : i64, scratch_operands = 0 : i64, tpu.core_type = #tpu.core_type<tc>, window_params = [{transform_indices = @transform_0, window_bounds = array<i64: 1, 4, 256>}, {transform_indices = @transform_1, window_bounds = array<i64: 1, 2, 256>}]} {
    %c0 = arith.constant 0 : index
    %c0_0 = arith.constant 0 : index
    %c0_1 = arith.constant 0 : index
    %0 = vector.load %arg2[%c0, %c0_0, %c0_1] : memref<1x4x256xf32, #tpu.memory_space<vmem>>, vector<1x4x256xf32>
    %1 = vector.shape_cast %0 : vector<1x4x256xf32> to vector<4x256xf32>
    %cst = arith.constant dense<0.000000e+00> : vector<256xf32>
    %2 = vector.multi_reduction <add>, %1, %cst [0] : vector<4x256xf32> to vector<256xf32>
    %3 = vector.shape_cast %2 : vector<256xf32> to vector<1x256xf32>
    %cst_2 = arith.constant dense<0xFF800000> : vector<256xf32>
    %4 = vector.multi_reduction <maximumf>, %1, %cst_2 [0] : vector<4x256xf32> to vector<256xf32>
    %5 = vector.shape_cast %4 : vector<256xf32> to vector<1x256xf32>
    %c0_i32 = arith.constant 0 : i32
    %6 = arith.cmpi eq, %arg1, %c0_i32 : i32
    %7 = arith.extui %6 : i1 to i32
    %c0_i32_3 = arith.constant 0 : i32
    %8 = arith.cmpi ne, %7, %c0_i32_3 : i32
    scf.if %8 {
      %c0_8 = arith.constant 0 : index
      %c0_9 = arith.constant 0 : index
      %c0_10 = arith.constant 0 : index
      %15 = vector.load %arg3[%c0_8, %c0_9, %c0_10] : memref<1x2x256xf32, #tpu.memory_space<vmem>>, vector<1x1x256xf32>
      %16 = vector.shape_cast %15 : vector<1x1x256xf32> to vector<1x256xf32>
      %17 = vector.shape_cast %3 : vector<1x256xf32> to vector<1x1x256xf32>
      tpu.vector_store %arg3[%c0_8, %c0_9, %c0_10], %17 {strides = array<i32>} : memref<1x2x256xf32, #tpu.memory_space<vmem>>, vector<1x1x256xf32>,
      %c0_11 = arith.constant 0 : index
      %c1 = arith.constant 1 : index
      %c0_12 = arith.constant 0 : index
      %18 = vector.load %arg3[%c0_11, %c1, %c0_12] : memref<1x2x256xf32, #tpu.memory_space<vmem>>, vector<1x1x256xf32>
      %19 = vector.shape_cast %18 : vector<1x1x256xf32> to vector<1x256xf32>
      %20 = vector.shape_cast %5 : vector<1x256xf32> to vector<1x1x256xf32>
      tpu.vector_store %arg3[%c0_11, %c1, %c0_12], %20 {strides = array<i32>} : memref<1x2x256xf32, #tpu.memory_space<vmem>>, vector<1x1x256xf32>,
    } else {
    }
    %c0_i32_4 = arith.constant 0 : i32
    %9 = arith.cmpi sgt, %arg1, %c0_i32_4 : i32
    %10 = arith.extui %9 : i1 to i32
    %c0_i32_5 = arith.constant 0 : i32
    %11 = arith.cmpi ne, %10, %c0_i32_5 : i32
    scf.if %11 {
      %c0_8 = arith.constant 0 : index
      %c0_9 = arith.constant 0 : index
      %c0_10 = arith.constant 0 : index
      %15 = vector.load %arg3[%c0_8, %c0_9, %c0_10] : memref<1x2x256xf32, #tpu.memory_space<vmem>>, vector<1x1x256xf32>
      %16 = vector.shape_cast %15 : vector<1x1x256xf32> to vector<1x256xf32>
      %17 = arith.addf %16, %3 : vector<1x256xf32>
      %c0_11 = arith.constant 0 : index
      %c0_12 = arith.constant 0 : index
      %c0_13 = arith.constant 0 : index
      %18 = vector.load %arg3[%c0_11, %c0_12, %c0_13] : memref<1x2x256xf32, #tpu.memory_space<vmem>>, vector<1x1x256xf32>
      %19 = vector.shape_cast %18 : vector<1x1x256xf32> to vector<1x256xf32>
      %20 = vector.shape_cast %17 : vector<1x256xf32> to vector<1x1x256xf32>
      tpu.vector_store %arg3[%c0_11, %c0_12, %c0_13], %20 {strides = array<i32>} : memref<1x2x256xf32, #tpu.memory_space<vmem>>, vector<1x1x256xf32>,
      %c0_14 = arith.constant 0 : index
      %c1 = arith.constant 1 : index
      %c0_15 = arith.constant 0 : index
      %21 = vector.load %arg3[%c0_14, %c1, %c0_15] : memref<1x2x256xf32, #tpu.memory_space<vmem>>, vector<1x1x256xf32>
      %22 = vector.shape_cast %21 : vector<1x1x256xf32> to vector<1x256xf32>
      %23 = arith.maximumf %22, %5 : vector<1x256xf32>
      %c0_16 = arith.constant 0 : index
      %c1_17 = arith.constant 1 : index
      %c0_18 = arith.constant 0 : index
      %24 = vector.load %arg3[%c0_16, %c1_17, %c0_18] : memref<1x2x256xf32, #tpu.memory_space<vmem>>, vector<1x1x256xf32>
      %25 = vector.shape_cast %24 : vector<1x1x256xf32> to vector<1x256xf32>
      %26 = vector.shape_cast %23 : vector<1x256xf32> to vector<1x1x256xf32>
      tpu.vector_store %arg3[%c0_16, %c1_17, %c0_18], %26 {strides = array<i32>} : memref<1x2x256xf32, #tpu.memory_space<vmem>>, vector<1x1x256xf32>,
    } else {
    }
    %c0_i32_6 = arith.constant 0 : i32
    %12 = arith.cmpi eq, %arg1, %c0_i32_6 : i32
    %13 = arith.extui %12 : i1 to i32
    %c0_i32_7 = arith.constant 0 : i32
    %14 = arith.cmpi ne, %13, %c0_i32_7 : i32
    scf.if %14 {
      %c0_8 = arith.constant 0 : index
      %c0_9 = arith.constant 0 : index
      %c0_10 = arith.constant 0 : index
      %15 = vector.load %arg3[%c0_8, %c0_9, %c0_10] : memref<1x2x256xf32, #tpu.memory_space<vmem>>, vector<1x1x256xf32>
      %16 = vector.shape_cast %15 : vector<1x1x256xf32> to vector<1x256xf32>
      %cst_11 = arith.constant 2.500000e-01 : f32
      %17 = vector.broadcast %cst_11 : f32 to vector<1x256xf32>
      %18 = arith.mulf %16, %17 : vector<1x256xf32>
      %c0_12 = arith.constant 0 : index
      %c0_13 = arith.constant 0 : index
      %c0_14 = arith.constant 0 : index
      %19 = vector.load %arg3[%c0_12, %c0_13, %c0_14] : memref<1x2x256xf32, #tpu.memory_space<vmem>>, vector<1x1x256xf32>
      %20 = vector.shape_cast %19 : vector<1x1x256xf32> to vector<1x256xf32>
      %21 = vector.shape_cast %18 : vector<1x256xf32> to vector<1x1x256xf32>
      tpu.vector_store %arg3[%c0_12, %c0_13, %c0_14], %21 {strides = array<i32>} : memref<1x2x256xf32, #tpu.memory_space<vmem>>, vector<1x1x256xf32>,
    } else {
    }
    return
  }
  func.func @transform_0(%arg0: i32, %arg1: i32) -> (i32, i32, i32) {
    %c0_i32 = arith.constant 0 : i32
    %c0_i32_0 = arith.constant 0 : i32
    return %arg0, %arg1, %c0_i32 : i32, i32, i32
  }
  func.func @transform_1(%arg0: i32, %arg1: i32) -> (i32, i32, i32) {
    %c0_i32 = arith.constant 0 : i32
    %c0_i32_0 = arith.constant 0 : i32
    %c0_i32_1 = arith.constant 0 : i32
    return %arg0, %c0_i32, %c0_i32_0 : i32, i32, i32
  }
}

</mosaic_0001>

<llo_original>
// kernel: tpu_custom_call.1
$region0: #{tpu_custom_call.1}
  #allocation0 [shape = 'u32[]', space=smem, size = 0x4, offset = 0x4, fixed_abs, tag = 'smem constant byte address 0x4 - core index']
  #allocation1 [shape = 'u32[144,128]{1,0:T(1,128)}', space=vmem, size = 0x12000, scoped, tag = 'internal scratch']
  %s0 = inlined_call_operand.hbm [shape: f32[2,4,256], index: 0, kind: input, shape index: {}]
  %s1 = inlined_call_operand.hbm [shape: f32[2,2,256], index: 1, kind: output, shape index: {}]
  %s2 = sld [smem:[#allocation0]]
  $region53: #{tpu_custom_call.1} parent=0
    _
  %s4 = ssub.s32 1, %s2
  %s5 = scalar_select 0, %s4, %s2
  $region1: #{tpu_custom_call.1} parent=0
    #allocation2 [shape = 'u8[8192]{0}', space=vmem, size = 0x2000, scoped, tag = 'input window, operand 0']
    #allocation3 [shape = 's32[2]{0}', space=sflag, size = 0x8, scoped, tag = 'scoped memory for tpu_custom_call.1']
    #allocation4 [shape = 's32[2]{0}', space=sflag, size = 0x8, scoped, tag = 'scoped memory for tpu_custom_call.1']
    #allocation5 [shape = 'u8[4096]{0}', space=vmem, size = 0x1000, scoped, tag = 'output window, operand 0']
    %6 = vsyncpa [#allocation3], 0
    %s7 = scalar_lea.sflag [#allocation3], 1
    %8 = vsyncpa %s7, 0
    %9 = vsyncpa [#allocation4], 0
    %s10 = scalar_lea.sflag [#allocation4], 1
    %11 = vsyncpa %s10, 0
    loop: start=0, step=1, limit=4
    $region2: #{tpu_custom_call.1} parent=1 // loop_pre_header
      _
    $region3: #{tpu_custom_call.1} parent=1 // loop_header
      %s13 = sphi 0, %s17
      %p14 = scmp.ge.s32.totalorder %s13, 4
      %s20 = sphi 0, %s32
      %s21 = sphi 0, %s28
      %s22 = sphi 0, %s20
      %s23 = sphi 0, %s21
      %s24 = sphi 0, %s22
      %s25 = sphi 0, %s23
      %s37 = sphi 0, %s39
      %s40 = sphi 0, %s37
      %s41 = sphi 0, %s40
      %s57 = sphi 0, %s41
      %s63 = sphi 0, %s65
      %s66 = sphi 0, %s63
      %s67 = sphi 0, %s66
      %s83 = sphi 0, %s67
    $region4: #{tpu_custom_call.1} parent=1 // loop_header_branch
      %16 = sbr.rel (%p14) target = $region8
    $region5: #{tpu_custom_call.1} parent=1 // loop_body
      %s18 = ssub.s32 %s13, 1
      %s19 = ssub.s32 %s13, 2
      %s26 = sadd.s32 1, %s21
      %p27 = scmp.ge.s32.totalorder %s26, 1
      %s28 = scalar_select %p27, 0, %s26
      %s29 = sadd.s32 1, %s20
      %s30 = scalar_select %p27, %s29, %s20
      %p31 = scmp.ge.s32.totalorder %s30, 2
      %s32 = scalar_select %p31, 0, %s30
      %s33 = ssub.s32 %s20, %s32
      %s34 = ssub.s32 %s21, %s28
      %s35 = sor.u32 %s33, %s34
      %p36 = scmp.eq.s32.totalorder %s35, 0
      %s38 = sadd.s32 %s37, 1
      %s39 = scalar_select %p36, %s37, %s38
      %p42 = pneg %p36
      %p43 = scmp.eq.s32.totalorder %s13, 1
      %p44 = por %p42, %p43
      %p45 = scmp.ne.s32.totalorder %s37, %s40
      %p46 = scmp.eq.s32.totalorder %s13, 0
      %p47 = por %p45, %p46
      %p48 = scmp.ne.s32.totalorder %s37, %s40
      %p49 = scmp.eq.s32.totalorder %s18, 1
      %p50 = por %p48, %p49
      %p51 = scmp.ne.s32.totalorder %s40, %s41
      %p52 = scmp.eq.s32.totalorder %s18, 0
      %p53 = por %p51, %p52
      %p54 = scmp.ne.s32.totalorder %s40, %s41
      %p55 = scmp.eq.s32.totalorder %s19, 1
      %p56 = por %p54, %p55
      %p58 = scmp.ne.s32.totalorder %s41, %s57
      %p59 = scmp.eq.s32.totalorder %s19, 0
      %p60 = por %p58, %p59
      %s61 = ssub.s32 %s20, %s32
      %p62 = scmp.eq.s32.totalorder %s61, 0
      %s64 = sadd.s32 %s63, 1
      %s65 = scalar_select %p62, %s63, %s64
      %p68 = pneg %p62
      %p69 = scmp.eq.s32.totalorder %s13, 1
      %p70 = por %p68, %p69
      %p71 = scmp.ne.s32.totalorder %s63, %s66
      %p72 = scmp.eq.s32.totalorder %s13, 0
      %p73 = por %p71, %p72
      %p74 = scmp.ne.s32.totalorder %s63, %s66
      %p75 = scmp.eq.s32.totalorder %s18, 1
      %p76 = por %p74, %p75
      %p77 = scmp.ne.s32.totalorder %s66, %s67
      %p78 = scmp.eq.s32.totalorder %s18, 0
      %p79 = por %p77, %p78
      %p80 = scmp.ne.s32.totalorder %s66, %s67
      %p81 = scmp.eq.s32.totalorder %s19, 1
      %p82 = por %p80, %p81
      %p84 = scmp.ne.s32.totalorder %s67, %s83
      %p85 = scmp.eq.s32.totalorder %s19, 0
      %p86 = por %p84, %p85
      %p87 = scmp.le.s32.totalorder 1, %s13
      %p88 = scmp.lt.s32.totalorder %s13, 3
      %p89 = pnand %p87, %p88
      %p90 = pneg %p89
      // Predicated region
      $region9: #{tpu_custom_call.1} parent=5 // pred_check
        _
      $region10: #{tpu_custom_call.1} parent=5 // pred_check_branch
        %92 = sbr.rel (%p89) target = $region12
      $region11: #{tpu_custom_call.1} parent=5 // pred_region
        %s93 = ssub.s32 %s13, 1
      $region12: #{tpu_custom_call.1} parent=5 // pred_fallthru
        _
      %p94 = scmp.lt.s32.totalorder %s13, 2
      // Predicated region
      $region13: #{tpu_custom_call.1} parent=5 // pred_check
        %p95 = pneg %p94
      $region14: #{tpu_custom_call.1} parent=5 // pred_check_branch
        %97 = sbr.rel (%p95) target = $region16
      $region15: #{tpu_custom_call.1} parent=5 // pred_region
        // Predicated region
        $region17: #{tpu_custom_call.1} parent=15 // pred_check
          %p98 = pneg %p47
        $region18: #{tpu_custom_call.1} parent=15 // pred_check_branch
          %100 = sbr.rel (%p98) target = $region20
        $region19: #{tpu_custom_call.1} parent=15 // pred_region
          %s101 = sand.u32 %s37, 1
          %s102 = scalar_lea.sflag [#allocation3], %s101
          %s103 = sand.u32 %s37, 1
          %s104 = smul.addr %s103, 8
          %s105 = scalar_lea.vmem [#allocation2], %s104
          %s107 = ssub.s32 128, 128
          %108 = vsyncadd %s102, %s107
          %s109 = smul.addr %s21, 2
          %s110 = smul.addr %s20, 2
          %s111 = sadd.s32 %s109, %s110
          %s112 = smul.addr %s111, 64
          %s113 = scalar_lea.hbm %s0, %s112
          %s115 = sshll.u32 %s105, 4
          %s116 = int_to_ptr.vmem [resolvable:$true] %s115
          %118 = dma.hbm_to_vmem [thread:$0]  %s113, 128, %s116, %s102
        $region20: #{tpu_custom_call.1} parent=15 // pred_fallthru
          _
      $region16: #{tpu_custom_call.1} parent=5 // pred_fallthru
        _
      %p119 = scmp.le.s32.totalorder 1, %s13
      %p120 = scmp.lt.s32.totalorder %s13, 3
      %p121 = pnand %p119, %p120
      %p122 = pneg %p121
      // Predicated region
      $region21: #{tpu_custom_call.1} parent=5 // pred_check
        _
      $region22: #{tpu_custom_call.1} parent=5 // pred_check_branch
        %124 = sbr.rel (%p121) target = $region24
      $region23: #{tpu_custom_call.1} parent=5 // pred_region
        %s125 = ssub.s32 %s13, 1
        %s126 = sand.u32 %s40, 1
        %s127 = scalar_lea.sflag [#allocation3], %s126
        %s128 = sand.u32 %s40, 1
        %s129 = smul.addr %s128, 8
        %s130 = scalar_lea.vmem [#allocation2], %s129
        // Predicated region
        $region25: #{tpu_custom_call.1} parent=23 // pred_check
          %p131 = pneg %p53
        $region26: #{tpu_custom_call.1} parent=23 // pred_check_branch
          %133 = sbr.rel (%p131) target = $region28
        $region27: #{tpu_custom_call.1} parent=23 // pred_region
          %134 = dma.done %s127, 128
        $region28: #{tpu_custom_call.1} parent=23 // pred_fallthru
          _
        %s135 = sand.u32 %s40, 1
        %s136 = scalar_lea.sflag [#allocation3], %s135
        %s137 = sand.u32 %s40, 1
        %s138 = smul.addr %s137, 8
        %s139 = scalar_lea.vmem [#allocation2], %s138
        %p140 = pneg %p53
        %p141 = pneg %p50
        %p142 = pneg %p79
        %p143 = pneg %p76
        %s144 = sand.u32 %s66, 1
        %s145 = scalar_lea.sflag [#allocation4], %s144
        %s146 = sand.u32 %s66, 1
        %s147 = smul.addr %s146, 4
        %s148 = scalar_lea.vmem [#allocation5], %s147
        %v149 = vld [vmem:[%s130] sm:$0xff]
        %v151 = vcombine.high %v149, %v149
        %vm153 = vcmask 1043456
        %v154 = vsel %vm153, %v149, 0.0
        %v155 = vrot.slane %v154, 4
        %v156 = vadd.f32 %v154, %v155
        %v157 = vrot.slane %v156, 2
        %v158 = vadd.f32 %v156, %v157
        %v159 = vrot.slane %v158, 1
        %v160 = vadd.f32 %v158, %v159
        %v161 = vsel %vm153, %v151, 0.0
        %v162 = vrot.slane %v161, 4
        %v163 = vadd.f32 %v161, %v162
        %v164 = vrot.slane %v163, 2
        %v165 = vadd.f32 %v163, %v164
        %v166 = vrot.slane %v165, 1
        %v167 = vadd.f32 %v165, %v166
        %v168 = vsel %vm153, %v149, -inf
        %v169 = vrot.slane %v168, 4
        %v170 = vmax.f32 %v168, %v169
        %v171 = vrot.slane %v170, 2
        %v172 = vmax.f32 %v170, %v171
        %v173 = vrot.slane %v172, 1
        %v174 = vmax.f32 %v172, %v173
        %v175 = vsel %vm153, %v151, -inf
        %v176 = vrot.slane %v175, 4
        %v177 = vmax.f32 %v175, %v176
        %v178 = vrot.slane %v177, 2
        %v179 = vmax.f32 %v177, %v178
        %v180 = vrot.slane %v179, 1
        %v181 = vmax.f32 %v179, %v180
        %p182 = scmp.eq.s32.totalorder %s23, 0
        // Predicated region
        $region29: #{tpu_custom_call.1} parent=23 // pred_check
          %p183 = pneg %p182
        $region30: #{tpu_custom_call.1} parent=23 // pred_check_branch
          %185 = sbr.rel (%p183) target = $region32
        $region31: #{tpu_custom_call.1} parent=23 // pred_region
          %v188 = vcombine.low %v160, %v167
          %v190 = vunpack.c.l.s4 1966171168
          %v191 = vunpack.c.0.s8 %v190
          %v192 = vlaneseq
          %v193 = vshrl.u32 %v192, 7
          %v194 = vsub.s32 %v191, %v193
          %v195 = vrot.slane %v188, %v194
          %v197 = vunpack.c.l.s4 1966171168
          %v198 = vunpack.c.0.s8 %v197
          %v199 = vlaneseq
          %v200 = vshrl.u32 %v199, 7
          %v201 = vsub.s32 %v198, %v200
          %v202 = vrot.slane %v195, %v201
          %v204 = vlaneseq
          %vm205 = vcmp.ge.s32.totalorder %v204, 0
          %vm206 = vcmp.lt.s32.totalorder %v204, 256
          %vm207 = vmand %vm205, %vm206
          %208 = vst.msk [vmem:[%s148] ss:$2 sm:$0x3] %vm207, %v202
          %v211 = vcombine.low %v174, %v181
          %v213 = vunpack.c.l.s4 1966171168
          %v214 = vunpack.c.0.s8 %v213
          %v215 = vlaneseq
          %v216 = vshrl.u32 %v215, 7
          %v217 = vsub.s32 %v214, %v216
          %v218 = vrot.slane %v211, %v217
          %v220 = vunpack.c.l.s4 1966171168
          %v221 = vunpack.c.0.s8 %v220
          %v222 = vlaneseq
          %v223 = vshrl.u32 %v222, 7
          %v224 = vsub.s32 %v221, %v223
          %v225 = vrot.slane %v218, %v224
          %s227 = scalar_lea.vmem %s148, 1 [#allocation5]
          %228 = vst.msk [vmem:[%s227] ss:$2 sm:$0x3] %vm207, %v225
        $region32: #{tpu_custom_call.1} parent=23 // pred_fallthru
          _
        %p229 = scmp.gt.s32.totalorder %s23, 0
        // Predicated region
        $region33: #{tpu_custom_call.1} parent=23 // pred_check
          %p230 = pneg %p229
        $region34: #{tpu_custom_call.1} parent=23 // pred_check_branch
          %232 = sbr.rel (%p230) target = $region36
        $region35: #{tpu_custom_call.1} parent=23 // pred_region
          %v233 = vld [vmem:[%s148] ss:$2 sm:$0x3]
          %v236 = vcombine.low %v160, %v167
          %v238 = vunpack.c.l.s4 1966171168
          %v239 = vunpack.c.0.s8 %v238
          %v240 = vlaneseq
          %v241 = vshrl.u32 %v240, 7
          %v242 = vsub.s32 %v239, %v241
          %v243 = vrot.slane %v236, %v242
          %v245 = vunpack.c.l.s4 1966171168
          %v246 = vunpack.c.0.s8 %v245
          %v247 = vlaneseq
          %v248 = vshrl.u32 %v247, 7
          %v249 = vsub.s32 %v246, %v248
          %v250 = vrot.slane %v243, %v249
          %v252 = vadd.f32 %v233, %v250
          %v253 = vlaneseq
          %vm254 = vcmp.ge.s32.totalorder %v253, 0
          %vm255 = vcmp.lt.s32.totalorder %v253, 256
          %vm256 = vmand %vm254, %vm255
          %257 = vst.msk [vmem:[%s148] ss:$2 sm:$0x3] %vm256, %v252
          %s258 = scalar_lea.vmem %s148, 1 [#allocation5]
          %v259 = vld [vmem:[%s258] ss:$2 sm:$0x3]
          %v262 = vcombine.low %v174, %v181
          %v264 = vunpack.c.l.s4 1966171168
          %v265 = vunpack.c.0.s8 %v264
          %v266 = vlaneseq
          %v267 = vshrl.u32 %v266, 7
          %v268 = vsub.s32 %v265, %v267
          %v269 = vrot.slane %v262, %v268
          %v271 = vunpack.c.l.s4 1966171168
          %v272 = vunpack.c.0.s8 %v271
          %v273 = vlaneseq
          %v274 = vshrl.u32 %v273, 7
          %v275 = vsub.s32 %v272, %v274
          %v276 = vrot.slane %v269, %v275
          %v278 = vmax.f32 %v259, %v276
          %279 = vst.msk [vmem:[%s258] ss:$2 sm:$0x3] %vm256, %v278
        $region36: #{tpu_custom_call.1} parent=23 // pred_fallthru
          _
        // Predicated region
        $region37: #{tpu_custom_call.1} parent=23 // pred_check
          %p280 = pneg %p182
        $region38: #{tpu_custom_call.1} parent=23 // pred_check_branch
          %282 = sbr.rel (%p280) target = $region40
        $region39: #{tpu_custom_call.1} parent=23 // pred_region
          %v283 = vld [vmem:[%s148] ss:$2 sm:$0x3]
          %v284 = vmul.f32 %v283, 0.25
          %v285 = vlaneseq
          %vm286 = vcmp.ge.s32.totalorder %v285, 0
          %vm287 = vcmp.lt.s32.totalorder %v285, 256
          %vm288 = vmand %vm286, %vm287
          %289 = vst.msk [vmem:[%s148] ss:$2 sm:$0x3] %vm288, %v284
        $region40: #{tpu_custom_call.1} parent=23 // pred_fallthru
          _
        %s290 = sand.u32 %s66, 1
        %s291 = scalar_lea.sflag [#allocation4], %s290
        %s292 = sand.u32 %s66, 1
        %s293 = smul.addr %s292, 4
        %s294 = scalar_lea.vmem [#allocation5], %s293
        // Predicated region
        $region41: #{tpu_custom_call.1} parent=23 // pred_check
          %p295 = pneg %p76
        $region42: #{tpu_custom_call.1} parent=23 // pred_check_branch
          %297 = sbr.rel (%p295) target = $region44
        $region43: #{tpu_custom_call.1} parent=23 // pred_region
          %s299 = ssub.s32 64, 64
          %300 = vsyncadd %s291, %s299
          %s301 = smul.addr %s22, 2
          %s302 = smul.addr %s301, 32
          %s303 = scalar_lea.hbm %s1, %s302
          %s305 = sshll.u32 %s294, 4
          %s306 = int_to_ptr.vmem [resolvable:$true] %s305
          %308 = dma.vmem_to_hbm [thread:$0]  %s306, 64, %s303, %s291
        $region44: #{tpu_custom_call.1} parent=23 // pred_fallthru
          _
      $region24: #{tpu_custom_call.1} parent=5 // pred_fallthru
        _
      %p309 = scmp.le.s32.totalorder 2, %s13
      // Predicated region
      $region45: #{tpu_custom_call.1} parent=5 // pred_check
        %p310 = pneg %p309
      $region46: #{tpu_custom_call.1} parent=5 // pred_check_branch
        %312 = sbr.rel (%p310) target = $region48
      $region47: #{tpu_custom_call.1} parent=5 // pred_region
        %s313 = ssub.s32 %s13, 2
        // Predicated region
        $region49: #{tpu_custom_call.1} parent=47 // pred_check
          %p314 = pneg %p82
        $region50: #{tpu_custom_call.1} parent=47 // pred_check_branch
          %316 = sbr.rel (%p314) target = $region52
        $region51: #{tpu_custom_call.1} parent=47 // pred_region
          %s317 = sand.u32 %s67, 1
          %s318 = scalar_lea.sflag [#allocation4], %s317
          %s319 = sand.u32 %s67, 1
          %s320 = smul.addr %s319, 4
          %s321 = scalar_lea.vmem [#allocation5], %s320
          %322 = dma.done %s318, 64
        $region52: #{tpu_custom_call.1} parent=47 // pred_fallthru
          _
      $region48: #{tpu_custom_call.1} parent=5 // pred_fallthru
        _
    $region6: #{tpu_custom_call.1} parent=1 // loop_footer
      %s17 = sadd.s32 1, %s13
    $region7: #{tpu_custom_call.1} parent=1 // loop_footer_branch
      %12 = sbr.rel target = $region3
    $region8: #{tpu_custom_call.1} parent=1 // loop_exit
      _
    %323 = vsyncpa [#allocation3], 1
    %s324 = scalar_lea.sflag [#allocation3], 1
    %325 = vsyncpa %s324, 1
    %326 = vsyncpa [#allocation4], 1
    %s327 = scalar_lea.sflag [#allocation4], 1
    %328 = vsyncpa %s327, 1

</llo_original>
